<compile_context>
chip_gen: v7x
topology: tpu7x:2x2x1
jax: 0.10.0
libtpu: 0.0.40
codegen_flags: <defaults>
</compile_context>

<pallas_src>
import jax
import jax.numpy as jnp
from jax.experimental import pallas as pl
from jax.experimental.pallas import tpu as pltpu

COND_BIAS = 1.0  # module default condition_bias=1.0


def _round_up(n, m):
    return ((n + m - 1) // m) * m


def _cond_mlp_kernel(x_ref, cond_ref, w1_ref, b1_ref, w2_ref, b2_ref, o_ref):
    # Feed the MXU in the native input dtype; accumulate in f32.
    h = jnp.dot(x_ref[...], w1_ref[...], preferred_element_type=jnp.float32)
    h = h + b1_ref[...]                        # biases pre-cast to f32 in wrapper

    cond_relu = jnp.maximum(cond_ref[...], 0)  # ReLU in the input dtype
    c = jnp.dot(cond_relu, w2_ref[...], preferred_element_type=jnp.float32)
    c = c + b2_ref[...]

    y = h * (COND_BIAS + c)                    # f32 elementwise gating
    o_ref[...] = jnp.maximum(y, 0.0).astype(o_ref.dtype)


def _vmem_capacity_bytes():
    # Generation-aware physical VMEM size (128 MiB on v5e/v6e, 64 MiB on v7x).
    try:
        info = pltpu.get_tpu_info()
        cap = getattr(info, "vmem_capacity_bytes", None)
        if cap:
            return int(cap)
    except Exception:
        pass
    return 64 * 1024 * 1024  # conservative fallback (v7x per-TC size)


def conditional_mlp(x, cond, w1, b1, w2, b2, *, block_rows=4096,
                    lane_pad_output=False):
    """x: [B, dim_in], cond: [B, dim_cond] -> [B, dim_out].

    With lane_pad_output=True the returned array has dim_out rounded up to a
    multiple of 128 (lane-dense stores, no slicing pass); use it only when the
    caller can consume the padded width.  Default keeps the true dim_out with
    masked stores (hidden under DMA in this HBM-bound kernel) and zero extra
    HBM passes.
    """
    B, dim_in = x.shape
    dim_cond = cond.shape[-1]
    dim_out = w1.shape[-1]
    out_dtype = x.dtype

    if b1.ndim == 1:
        b1 = b1.reshape(1, -1)
    if b2.ndim == 1:
        b2 = b2.reshape(1, -1)

    # Optional lane-dense output (padded result is returned as-is, never sliced).
    if lane_pad_output and dim_out % 128 != 0:
        pad = _round_up(dim_out, 128) - dim_out
        w1 = jnp.pad(w1, ((0, 0), (0, pad)))
        w2 = jnp.pad(w2, ((0, 0), (0, pad)))
        b1 = jnp.pad(b1, ((0, 0), (0, pad)))
        b2 = jnp.pad(b2, ((0, 0), (0, pad)))
        dim_out += pad

    # Pre-cast biases to f32 once so the kernel does no per-step casts.
    b1 = b1.astype(jnp.float32)
    b2 = b2.astype(jnp.float32)

    # ---- dtype-dependent sublane multiple for the row tile -----------------
    itemsize = jnp.dtype(x.dtype).itemsize
    sublane = max(8, 32 // itemsize)            # 8 f32, 16 bf16, 32 int8/fp8

    # ---- generation-aware VMEM budget ---------------------------------------
    vmem_cap = _vmem_capacity_bytes()
    budget = min(int(vmem_cap * 0.6), 80 * 1024 * 1024)   # ~76 MiB v5e/v6e, ~38 MiB v7x

    x_bytes = jnp.dtype(x.dtype).itemsize
    c_bytes = jnp.dtype(cond.dtype).itemsize
    o_bytes = jnp.dtype(out_dtype).itemsize
    # Streamed tiles are double-buffered; f32 temporaries (h, c, y) counted too.
    per_row = (2 * (dim_in * x_bytes + dim_cond * c_bytes + dim_out * o_bytes)
               + 3 * dim_out * 4)
    # Resident weights/biases (single-buffered: constant index_map).
    w_bytes = ((w1.size + w2.size) * jnp.dtype(w1.dtype).itemsize
               + (b1.size + b2.size) * 4)

    # ---- pick the row tile: as large as fits, then megacore-friendly -------
    bm = min(block_rows, _round_up(B, sublane))
    bm = max(sublane, _round_up(bm, sublane))
    while bm > sublane and (bm * per_row + w_bytes) > budget:
        bm = max(sublane, _round_up(bm // 2, sublane))

    # Keep >= 2 grid steps so the "parallel" axis can span both TensorCores on
    # v7x (cheap on single-TC parts: one extra ~0.35 us step).
    if _round_up(B, sublane) > sublane:
        bm = min(bm, max(sublane, _round_up(pl.cdiv(B, 2), sublane)))
    if bm > B:
        bm = B  # block dim equal to the full (small) batch is always legal

    grid_rows = pl.cdiv(B, bm)

    # Always pass an explicit scoped-VMEM limit (v5e defaults to only 16 MiB).
    # 2*w_bytes keeps the estimate valid for the double-buffered fallback too.
    est = bm * per_row + 2 * w_bytes + (2 << 20)
    vmem_limit = int(min(max(est, 32 * 1024 * 1024), int(vmem_cap * 0.9)))

    flops = 2 * B * dim_out * (dim_in + dim_cond) + 4 * B * dim_out
    bytes_accessed = (x.size * x_bytes + cond.size * c_bytes
                      + B * dim_out * o_bytes + int(w_bytes))
    cost = pl.CostEstimate(flops=int(flops), transcendentals=0,
                           bytes_accessed=int(bytes_accessed))

    def weight_spec(shape, single_buffer):
        if single_buffer:
            return pl.BlockSpec(shape, lambda i: (0, 0),
                                pipeline_mode=pl.Buffered(1))
        return pl.BlockSpec(shape, lambda i: (0, 0))

    def build(single_buffer_weights):
        return pl.pallas_call(
            _cond_mlp_kernel,
            out_shape=jax.ShapeDtypeStruct((B, dim_out), out_dtype),
            grid_spec=pltpu.PrefetchScalarGridSpec(
                num_scalar_prefetch=0,
                grid=(grid_rows,),
                in_specs=[
                    pl.BlockSpec((bm, dim_in), lambda i: (i, 0)),        # x tile
                    pl.BlockSpec((bm, dim_cond), lambda i: (i, 0)),      # cond tile
                    weight_spec((dim_in, dim_out), single_buffer_weights),    # W1
                    weight_spec((1, dim_out), single_buffer_weights),         # b1
                    weight_spec((dim_cond, dim_out), single_buffer_weights),  # W2
                    weight_spec((1, dim_out), single_buffer_weights),         # b2
                ],
                out_specs=pl.BlockSpec((bm, dim_out), lambda i: (i, 0)),
            ),
            compiler_params=pltpu.CompilerParams(
                dimension_semantics=("parallel",),
                vmem_limit_bytes=vmem_limit,
            ),
            cost_estimate=cost,
        )

    try:
        out = build(True)(x, cond, w1, b1, w2, b2)
    except Exception:
        # TODO(synk): toolchain rejected pl.Buffered(1) single-buffering of the
        # resident weights; fall back to default double-buffering (only costs
        # one extra weight copy in VMEM).
        out = build(False)(x, cond, w1, b1, w2, b2)
    return out


def reference(x, cond, w1, b1, w2, b2):
    h = x @ w1 + b1
    c = jnp.maximum(cond, 0.0) @ w2 + b2
    return jnp.maximum(h * (COND_BIAS + c), 0.0)


if __name__ == "__main__":
    # B deliberately not a multiple of 8 (exercises the in-kernel ragged tail,
    # no wrapper padding) and dim_out < 128 (exercises the true-width output).
    B, dim_in, dim_cond, dim_out = 10, 32, 16, 32

    key = jax.random.PRNGKey(0)
    kx, kc, kw1, kb1, kw2, kb2 = jax.random.split(key, 6)

    x = jax.random.normal(kx, (B, dim_in), dtype=jnp.float32)
    cond = jax.random.normal(kc, (B, dim_cond), dtype=jnp.float32)

    # Deterministic parameter init (PyTorch-Linear-like uniform ranges).
    lim1 = 1.0 / (dim_in ** 0.5)
    lim2 = 1.0 / (dim_cond ** 0.5)
    w1 = jax.random.uniform(kw1, (dim_in, dim_out), jnp.float32, -lim1, lim1)
    b1 = jax.random.uniform(kb1, (1, dim_out), jnp.float32, -lim1, lim1)
    w2 = jax.random.uniform(kw2, (dim_cond, dim_out), jnp.float32, -lim2, lim2)
    b2 = jax.random.uniform(kb2, (1, dim_out), jnp.float32, -lim2, lim2)

    out = conditional_mlp(x, cond, w1, b1, w2, b2)
    out = jax.block_until_ready(out)

    ref = reference(x, cond, w1, b1, w2, b2)
    assert out.shape == (B, dim_out)
    assert jnp.allclose(out, ref, atol=1e-4, rtol=1e-4)

    print("KERNEL_OK")
</pallas_src>

<mosaic_0001>
module attributes {stable_mosaic.version = 11 : i64} {
  func.func @_cond_mlp_kernel(%arg0: i32, %arg1: memref<8x32xf32, #tpu.memory_space<vmem>>, %arg2: memref<8x16xf32, #tpu.memory_space<vmem>>, %arg3: memref<32x32xf32, #tpu.memory_space<vmem>>, %arg4: memref<1x32xf32, #tpu.memory_space<vmem>>, %arg5: memref<16x32xf32, #tpu.memory_space<vmem>>, %arg6: memref<1x32xf32, #tpu.memory_space<vmem>>, %arg7: memref<8x32xf32, #tpu.memory_space<vmem>>) attributes {dimension_semantics = [#tpu.dimension_semantics<parallel>], iteration_bounds = array<i64: 2>, scalar_prefetch = 0 : i64, scratch_operands = 0 : i64, tpu.core_type = #tpu.core_type<tc>, window_params = [{transform_indices = @transform_0, window_bounds = array<i64: 8, 32>}, {transform_indices = @transform_1, window_bounds = array<i64: 8, 16>}, {pipeline_mode = #tpu.pipeline_mode<synchronous>, transform_indices = @transform_2, window_bounds = array<i64: 32, 32>}, {pipeline_mode = #tpu.pipeline_mode<synchronous>, transform_indices = @transform_3, window_bounds = array<i64: 1, 32>}, {pipeline_mode = #tpu.pipeline_mode<synchronous>, transform_indices = @transform_4, window_bounds = array<i64: 16, 32>}, {pipeline_mode = #tpu.pipeline_mode<synchronous>, transform_indices = @transform_5, window_bounds = array<i64: 1, 32>}, {transform_indices = @transform_6, window_bounds = array<i64: 8, 32>}]} {
    %c0 = arith.constant 0 : index
    %c0_0 = arith.constant 0 : index
    %0 = vector.load %arg1[%c0, %c0_0] : memref<8x32xf32, #tpu.memory_space<vmem>>, vector<8x32xf32>
    %c0_1 = arith.constant 0 : index
    %c0_2 = arith.constant 0 : index
    %1 = vector.load %arg3[%c0_1, %c0_2] : memref<32x32xf32, #tpu.memory_space<vmem>>, vector<32x32xf32>
    %cst = arith.constant dense<0.000000e+00> : vector<8x32xf32>
    %2 = tpu.matmul %0, %1, %cst {dimension_numbers = #tpu.dot_dimension_numbers<[1], [0], [0], [1], [0, 0, 1, 1], [], []>} : vector<8x32xf32>, vector<32x32xf32>, vector<8x32xf32> -> vector<8x32xf32>
    %c0_3 = arith.constant 0 : index
    %c0_4 = arith.constant 0 : index
    %3 = vector.load %arg4[%c0_3, %c0_4] : memref<1x32xf32, #tpu.memory_space<vmem>>, vector<1x32xf32>
    %4 = vector.broadcast %3 : vector<1x32xf32> to vector<8x32xf32>
    %5 = arith.addf %2, %4 : vector<8x32xf32>
    %c0_5 = arith.constant 0 : index
    %c0_6 = arith.constant 0 : index
    %6 = vector.load %arg2[%c0_5, %c0_6] : memref<8x16xf32, #tpu.memory_space<vmem>>, vector<8x16xf32>
    %cst_7 = arith.constant 0.000000e+00 : f32
    %7 = vector.broadcast %cst_7 : f32 to vector<8x16xf32>
    %8 = arith.maximumf %6, %7 : vector<8x16xf32>
    %c0_8 = arith.constant 0 : index
    %c0_9 = arith.constant 0 : index
    %9 = vector.load %arg5[%c0_8, %c0_9] : memref<16x32xf32, #tpu.memory_space<vmem>>, vector<16x32xf32>
    %cst_10 = arith.constant dense<0.000000e+00> : vector<8x32xf32>
    %10 = tpu.matmul %8, %9, %cst_10 {dimension_numbers = #tpu.dot_dimension_numbers<[1], [0], [0], [1], [0, 0, 1, 1], [], []>} : vector<8x16xf32>, vector<16x32xf32>, vector<8x32xf32> -> vector<8x32xf32>
    %c0_11 = arith.constant 0 : index
    %c0_12 = arith.constant 0 : index
    %11 = vector.load %arg6[%c0_11, %c0_12] : memref<1x32xf32, #tpu.memory_space<vmem>>, vector<1x32xf32>
    %12 = vector.broadcast %11 : vector<1x32xf32> to vector<8x32xf32>
    %13 = arith.addf %10, %12 : vector<8x32xf32>
    %cst_13 = arith.constant 1.000000e+00 : f32
    %14 = vector.broadcast %cst_13 : f32 to vector<8x32xf32>
    %15 = arith.addf %14, %13 : vector<8x32xf32>
    %16 = arith.mulf %5, %15 : vector<8x32xf32>
    %cst_14 = arith.constant 0.000000e+00 : f32
    %17 = vector.broadcast %cst_14 : f32 to vector<8x32xf32>
    %18 = arith.maximumf %16, %17 : vector<8x32xf32>
    %c0_15 = arith.constant 0 : index
    %c0_16 = arith.constant 0 : index
    %19 = vector.load %arg7[%c0_15, %c0_16] : memref<8x32xf32, #tpu.memory_space<vmem>>, vector<8x32xf32>
    tpu.vector_store %arg7[%c0_15, %c0_16], %18 {strides = array<i32>} : memref<8x32xf32, #tpu.memory_space<vmem>>, vector<8x32xf32>,
    return
  }
  func.func @transform_0(%arg0: i32) -> (i32, i32) {
    %c0_i32 = arith.constant 0 : i32
    %c0_i32_0 = arith.constant 0 : i32
    return %arg0, %c0_i32 : i32, i32
  }
  func.func @transform_1(%arg0: i32) -> (i32, i32) {
    %c0_i32 = arith.constant 0 : i32
    %c0_i32_0 = arith.constant 0 : i32
    return %arg0, %c0_i32 : i32, i32
  }
  func.func @transform_2(%arg0: i32) -> (i32, i32) {
    %c0_i32 = arith.constant 0 : i32
    %c0_i32_0 = arith.constant 0 : i32
    %c0_i32_1 = arith.constant 0 : i32
    return %c0_i32, %c0_i32_0 : i32, i32
  }
  func.func @transform_3(%arg0: i32) -> (i32, i32) {
    %c0_i32 = arith.constant 0 : i32
    %c0_i32_0 = arith.constant 0 : i32
    %c0_i32_1 = arith.constant 0 : i32
    return %c0_i32, %c0_i32_0 : i32, i32
  }
  func.func @transform_4(%arg0: i32) -> (i32, i32) {
    %c0_i32 = arith.constant 0 : i32
    %c0_i32_0 = arith.constant 0 : i32
    %c0_i32_1 = arith.constant 0 : i32
    return %c0_i32, %c0_i32_0 : i32, i32
  }
  func.func @transform_5(%arg0: i32) -> (i32, i32) {
    %c0_i32 = arith.constant 0 : i32
    %c0_i32_0 = arith.constant 0 : i32
    %c0_i32_1 = arith.constant 0 : i32
    return %c0_i32, %c0_i32_0 : i32, i32
  }
  func.func @transform_6(%arg0: i32) -> (i32, i32) {
    %c0_i32 = arith.constant 0 : i32
    %c0_i32_0 = arith.constant 0 : i32
    return %arg0, %c0_i32 : i32, i32
  }
}

module attributes {stable_mosaic.version = 11 : i64} {
  func.func @_cond_mlp_kernel(%arg0: i32, %arg1: memref<8x32xf32, #tpu.memory_space<vmem>>, %arg2: memref<8x16xf32, #tpu.memory_space<vmem>>, %arg3: memref<32x32xf32, #tpu.memory_space<vmem>>, %arg4: memref<1x32xf32, #tpu.memory_space<vmem>>, %arg5: memref<16x32xf32, #tpu.memory_space<vmem>>, %arg6: memref<1x32xf32, #tpu.memory_space<vmem>>, %arg7: memref<8x32xf32, #tpu.memory_space<vmem>>) attributes {dimension_semantics = [#tpu.dimension_semantics<parallel>], iteration_bounds = array<i64: 2>, scalar_prefetch = 0 : i64, scratch_operands = 0 : i64, tpu.core_type = #tpu.core_type<tc>, window_params = [{transform_indices = @transform_0, window_bounds = array<i64: 8, 32>}, {transform_indices = @transform_1, window_bounds = array<i64: 8, 16>}, {pipeline_mode = #tpu.pipeline_mode<synchronous>, transform_indices = @transform_2, window_bounds = array<i64: 32, 32>}, {pipeline_mode = #tpu.pipeline_mode<synchronous>, transform_indices = @transform_3, window_bounds = array<i64: 1, 32>}, {pipeline_mode = #tpu.pipeline_mode<synchronous>, transform_indices = @transform_4, window_bounds = array<i64: 16, 32>}, {pipeline_mode = #tpu.pipeline_mode<synchronous>, transform_indices = @transform_5, window_bounds = array<i64: 1, 32>}, {transform_indices = @transform_6, window_bounds = array<i64: 8, 32>}]} {
    %c0 = arith.constant 0 : index
    %c0_0 = arith.constant 0 : index
    %0 = vector.load %arg1[%c0, %c0_0] : memref<8x32xf32, #tpu.memory_space<vmem>>, vector<8x32xf32>
    %c0_1 = arith.constant 0 : index
    %c0_2 = arith.constant 0 : index
    %1 = vector.load %arg3[%c0_1, %c0_2] : memref<32x32xf32, #tpu.memory_space<vmem>>, vector<32x32xf32>
    %cst = arith.constant dense<0.000000e+00> : vector<8x32xf32>
    %2 = tpu.matmul %0, %1, %cst {dimension_numbers = #tpu.dot_dimension_numbers<[1], [0], [0], [1], [0, 0, 1, 1], [], []>} : vector<8x32xf32>, vector<32x32xf32>, vector<8x32xf32> -> vector<8x32xf32>
    %c0_3 = arith.constant 0 : index
    %c0_4 = arith.constant 0 : index
    %3 = vector.load %arg4[%c0_3, %c0_4] : memref<1x32xf32, #tpu.memory_space<vmem>>, vector<1x32xf32>
    %4 = vector.broadcast %3 : vector<1x32xf32> to vector<8x32xf32>
    %5 = arith.addf %2, %4 : vector<8x32xf32>
    %c0_5 = arith.constant 0 : index
    %c0_6 = arith.constant 0 : index
    %6 = vector.load %arg2[%c0_5, %c0_6] : memref<8x16xf32, #tpu.memory_space<vmem>>, vector<8x16xf32>
    %cst_7 = arith.constant 0.000000e+00 : f32
    %7 = vector.broadcast %cst_7 : f32 to vector<8x16xf32>
    %8 = arith.maximumf %6, %7 : vector<8x16xf32>
    %c0_8 = arith.constant 0 : index
    %c0_9 = arith.constant 0 : index
    %9 = vector.load %arg5[%c0_8, %c0_9] : memref<16x32xf32, #tpu.memory_space<vmem>>, vector<16x32xf32>
    %cst_10 = arith.constant dense<0.000000e+00> : vector<8x32xf32>
    %10 = tpu.matmul %8, %9, %cst_10 {dimension_numbers = #tpu.dot_dimension_numbers<[1], [0], [0], [1], [0, 0, 1, 1], [], []>} : vector<8x16xf32>, vector<16x32xf32>, vector<8x32xf32> -> vector<8x32xf32>
    %c0_11 = arith.constant 0 : index
    %c0_12 = arith.constant 0 : index
    %11 = vector.load %arg6[%c0_11, %c0_12] : memref<1x32xf32, #tpu.memory_space<vmem>>, vector<1x32xf32>
    %12 = vector.broadcast %11 : vector<1x32xf32> to vector<8x32xf32>
    %13 = arith.addf %10, %12 : vector<8x32xf32>
    %cst_13 = arith.constant 1.000000e+00 : f32
    %14 = vector.broadcast %cst_13 : f32 to vector<8x32xf32>
    %15 = arith.addf %14, %13 : vector<8x32xf32>
    %16 = arith.mulf %5, %15 : vector<8x32xf32>
    %cst_14 = arith.constant 0.000000e+00 : f32
    %17 = vector.broadcast %cst_14 : f32 to vector<8x32xf32>
    %18 = arith.maximumf %16, %17 : vector<8x32xf32>
    %c0_15 = arith.constant 0 : index
    %c0_16 = arith.constant 0 : index
    %19 = vector.load %arg7[%c0_15, %c0_16] : memref<8x32xf32, #tpu.memory_space<vmem>>, vector<8x32xf32>
    tpu.vector_store %arg7[%c0_15, %c0_16], %18 {strides = array<i32>} : memref<8x32xf32, #tpu.memory_space<vmem>>, vector<8x32xf32>,
    return
  }
  func.func @transform_0(%arg0: i32) -> (i32, i32) {
    %c0_i32 = arith.constant 0 : i32
    %c0_i32_0 = arith.constant 0 : i32
    return %arg0, %c0_i32 : i32, i32
  }
  func.func @transform_1(%arg0: i32) -> (i32, i32) {
    %c0_i32 = arith.constant 0 : i32
    %c0_i32_0 = arith.constant 0 : i32
    return %arg0, %c0_i32 : i32, i32
  }
  func.func @transform_2(%arg0: i32) -> (i32, i32) {
    %c0_i32 = arith.constant 0 : i32
    %c0_i32_0 = arith.constant 0 : i32
    %c0_i32_1 = arith.constant 0 : i32
    return %c0_i32, %c0_i32_0 : i32, i32
  }
  func.func @transform_3(%arg0: i32) -> (i32, i32) {
    %c0_i32 = arith.constant 0 : i32
    %c0_i32_0 = arith.constant 0 : i32
    %c0_i32_1 = arith.constant 0 : i32
    return %c0_i32, %c0_i32_0 : i32, i32
  }
  func.func @transform_4(%arg0: i32) -> (i32, i32) {
    %c0_i32 = arith.constant 0 : i32
    %c0_i32_0 = arith.constant 0 : i32
    %c0_i32_1 = arith.constant 0 : i32
    return %c0_i32, %c0_i32_0 : i32, i32
  }
  func.func @transform_5(%arg0: i32) -> (i32, i32) {
    %c0_i32 = arith.constant 0 : i32
    %c0_i32_0 = arith.constant 0 : i32
    %c0_i32_1 = arith.constant 0 : i32
    return %c0_i32, %c0_i32_0 : i32, i32
  }
  func.func @transform_6(%arg0: i32) -> (i32, i32) {
    %c0_i32 = arith.constant 0 : i32
    %c0_i32_0 = arith.constant 0 : i32
    return %arg0, %c0_i32 : i32, i32
  }
}

</mosaic_0001>

<llo_original>
// kernel: tpu_custom_call.1
$region0: #{tpu_custom_call.1}
  #allocation0 [shape = 'u32[]', space=smem, size = 0x4, offset = 0x4, fixed_abs, tag = 'smem constant byte address 0x4 - core index']
  #allocation1 [shape = 'u32[144,128]{1,0:T(1,128)}', space=vmem, size = 0x12000, scoped, tag = 'internal scratch']
  %s0 = inlined_call_operand.hbm [shape: f32[10,32], index: 0, kind: input, shape index: {}]
  %s1 = inlined_call_operand.hbm [shape: f32[10,16], index: 1, kind: input, shape index: {}]
  %s2 = inlined_call_operand.hbm [shape: f32[32,32], index: 2, kind: input, shape index: {}]
  %s3 = inlined_call_operand.vmem [shape: f32[1,32], index: 3, kind: input, shape index: {}]
  %s4 = inlined_call_operand.hbm [shape: f32[16,32], index: 4, kind: input, shape index: {}]
  %s5 = inlined_call_operand.vmem [shape: f32[1,32], index: 5, kind: input, shape index: {}]
  %s6 = inlined_call_operand.hbm [shape: f32[10,32], index: 6, kind: output, shape index: {}]
  %s7 = sld [smem:[#allocation0]]
  $region73: #{tpu_custom_call.1} parent=0
    _
  %s9 = ssub.s32 1, %s7
  %s10 = scalar_select 0, %s9, %s7
  $region1: #{tpu_custom_call.1} parent=0
    #allocation2 [shape = 'u8[8192]{0}', space=vmem, size = 0x2000, scoped, tag = 'input window, operand 0']
    #allocation3 [shape = 's32[2]{0}', space=sflag, size = 0x8, scoped, tag = 'scoped memory for tpu_custom_call.1']
    #allocation4 [shape = 's32[2]{0}', space=sflag, size = 0x8, scoped, tag = 'scoped memory for tpu_custom_call.1']
    #allocation5 [shape = 'u8[8192]{0}', space=vmem, size = 0x2000, scoped, tag = 'input window, operand 1']
    #allocation6 [shape = 's32[2]{0}', space=sflag, size = 0x8, scoped, tag = 'scoped memory for tpu_custom_call.1']
    #allocation7 [shape = 'u8[16384]{0}', space=vmem, size = 0x4000, scoped, tag = 'input window, operand 2, single buffered']
    #allocation8 [shape = 'u8[8192]{0}', space=vmem, size = 0x2000, scoped, tag = 'input window, operand 4, single buffered']
    #allocation9 [shape = 's32[1]{0}', space=sflag, size = 0x4, scoped, tag = 'scoped memory for tpu_custom_call.1']
    #allocation10 [shape = 'u8[8192]{0}', space=vmem, size = 0x2000, scoped, tag = 'output window, operand 0']
    %11 = vsyncpa [#allocation3], 0
    %s12 = scalar_lea.sflag [#allocation3], 1
    %13 = vsyncpa %s12, 0
    %14 = vsyncpa [#allocation6], 0
    %s15 = scalar_lea.sflag [#allocation6], 1
    %16 = vsyncpa %s15, 0
    %17 = vsyncpa [#allocation9], 0
    %18 = vsyncpa [#allocation4], 0
    %s19 = scalar_lea.sflag [#allocation4], 1
    %20 = vsyncpa %s19, 0
    loop: start=0, step=1, limit=4
    $region2: #{tpu_custom_call.1} parent=1 // loop_pre_header
      _
    $region3: #{tpu_custom_call.1} parent=1 // loop_header
      %s22 = sphi 0, %s26
      %p23 = scmp.ge.s32.totalorder %s22, 4
      %s32 = sphi 0, %s34
      %s35 = sphi 0, %s32
      %s36 = sphi 0, %s35
      %s52 = sphi 0, %s36
      %s58 = sphi 0, %s60
      %s61 = sphi 0, %s58
      %s62 = sphi 0, %s61
      %s78 = sphi 0, %s62
      %s82 = sphi 0, %s82
      %s84 = sphi 0, %s82
      %s85 = sphi 0, %s84
      %s99 = sphi 0, %s85
      %s103 = sphi 0, %s103
      %s105 = sphi 0, %s103
      %s106 = sphi 0, %s105
      %s120 = sphi 0, %s106
      %s124 = sphi 0, %s124
      %s126 = sphi 0, %s124
      %s127 = sphi 0, %s126
      %s141 = sphi 0, %s127
      %s145 = sphi 0, %s145
      %s147 = sphi 0, %s145
      %s148 = sphi 0, %s147
      %s162 = sphi 0, %s148
      %s168 = sphi 0, %s170
      %s171 = sphi 0, %s168
      %s172 = sphi 0, %s171
      %s188 = sphi 0, %s172
    $region4: #{tpu_custom_call.1} parent=1 // loop_header_branch
      %25 = sbr.rel (%p23) target = $region8
    $region5: #{tpu_custom_call.1} parent=1 // loop_body
      %s27 = ssub.s32 %s22, 1
      %s28 = ssub.s32 %s22, 2
      %s29 = sadd.s32 %s22, 1
      %s30 = ssub.s32 %s22, %s29
      %p31 = scmp.eq.s32.totalorder %s30, 0
      %s33 = sadd.s32 %s32, 1
      %s34 = scalar_select %p31, %s32, %s33
      %p37 = pneg %p31
      %p38 = scmp.eq.s32.totalorder %s22, 1
      %p39 = por %p37, %p38
      %p40 = scmp.ne.s32.totalorder %s32, %s35
      %p41 = scmp.eq.s32.totalorder %s22, 0
      %p42 = por %p40, %p41
      %p43 = scmp.ne.s32.totalorder %s32, %s35
      %p44 = scmp.eq.s32.totalorder %s27, 1
      %p45 = por %p43, %p44
      %p46 = scmp.ne.s32.totalorder %s35, %s36
      %p47 = scmp.eq.s32.totalorder %s27, 0
      %p48 = por %p46, %p47
      %p49 = scmp.ne.s32.totalorder %s35, %s36
      %p50 = scmp.eq.s32.totalorder %s28, 1
      %p51 = por %p49, %p50
      %p53 = scmp.ne.s32.totalorder %s36, %s52
      %p54 = scmp.eq.s32.totalorder %s28, 0
      %p55 = por %p53, %p54
      %s56 = ssub.s32 %s22, %s29
      %p57 = scmp.eq.s32.totalorder %s56, 0
      %s59 = sadd.s32 %s58, 1
      %s60 = scalar_select %p57, %s58, %s59
      %p63 = pneg %p57
      %p64 = scmp.eq.s32.totalorder %s22, 1
      %p65 = por %p63, %p64
      %p66 = scmp.ne.s32.totalorder %s58, %s61
      %p67 = scmp.eq.s32.totalorder %s22, 0
      %p68 = por %p66, %p67
      %p69 = scmp.ne.s32.totalorder %s58, %s61
      %p70 = scmp.eq.s32.totalorder %s27, 1
      %p71 = por %p69, %p70
      %p72 = scmp.ne.s32.totalorder %s61, %s62
      %p73 = scmp.eq.s32.totalorder %s27, 0
      %p74 = por %p72, %p73
      %p75 = scmp.ne.s32.totalorder %s61, %s62
      %p76 = scmp.eq.s32.totalorder %s28, 1
      %p77 = por %p75, %p76
      %p79 = scmp.ne.s32.totalorder %s62, %s78
      %p80 = scmp.eq.s32.totalorder %s28, 0
      %p81 = por %p79, %p80
      %s83 = sadd.s32 %s82, 1
      %p86 = scmp.eq.s32.totalorder %s22, 1
      %p87 = scmp.ne.s32.totalorder %s82, %s84
      %p88 = scmp.eq.s32.totalorder %s22, 0
      %p89 = por %p87, %p88
      %p90 = scmp.ne.s32.totalorder %s82, %s84
      %p91 = scmp.eq.s32.totalorder %s27, 1
      %p92 = por %p90, %p91
      %p93 = scmp.ne.s32.totalorder %s84, %s85
      %p94 = scmp.eq.s32.totalorder %s27, 0
      %p95 = por %p93, %p94
      %p96 = scmp.ne.s32.totalorder %s84, %s85
      %p97 = scmp.eq.s32.totalorder %s28, 1
      %p98 = por %p96, %p97
      %p100 = scmp.ne.s32.totalorder %s85, %s99
      %p101 = scmp.eq.s32.totalorder %s28, 0
      %p102 = por %p100, %p101
      %s104 = sadd.s32 %s103, 1
      %p107 = scmp.eq.s32.totalorder %s22, 1
      %p108 = scmp.ne.s32.totalorder %s103, %s105
      %p109 = scmp.eq.s32.totalorder %s22, 0
      %p110 = por %p108, %p109
      %p111 = scmp.ne.s32.totalorder %s103, %s105
      %p112 = scmp.eq.s32.totalorder %s27, 1
      %p113 = por %p111, %p112
      %p114 = scmp.ne.s32.totalorder %s105, %s106
      %p115 = scmp.eq.s32.totalorder %s27, 0
      %p116 = por %p114, %p115
      %p117 = scmp.ne.s32.totalorder %s105, %s106
      %p118 = scmp.eq.s32.totalorder %s28, 1
      %p119 = por %p117, %p118
      %p121 = scmp.ne.s32.totalorder %s106, %s120
      %p122 = scmp.eq.s32.totalorder %s28, 0
      %p123 = por %p121, %p122
      %s125 = sadd.s32 %s124, 1
      %p128 = scmp.eq.s32.totalorder %s22, 1
      %p129 = scmp.ne.s32.totalorder %s124, %s126
      %p130 = scmp.eq.s32.totalorder %s22, 0
      %p131 = por %p129, %p130
      %p132 = scmp.ne.s32.totalorder %s124, %s126
      %p133 = scmp.eq.s32.totalorder %s27, 1
      %p134 = por %p132, %p133
      %p135 = scmp.ne.s32.totalorder %s126, %s127
      %p136 = scmp.eq.s32.totalorder %s27, 0
      %p137 = por %p135, %p136
      %p138 = scmp.ne.s32.totalorder %s126, %s127
      %p139 = scmp.eq.s32.totalorder %s28, 1
      %p140 = por %p138, %p139
      %p142 = scmp.ne.s32.totalorder %s127, %s141
      %p143 = scmp.eq.s32.totalorder %s28, 0
      %p144 = por %p142, %p143
      %s146 = sadd.s32 %s145, 1
      %p149 = scmp.eq.s32.totalorder %s22, 1
      %p150 = scmp.ne.s32.totalorder %s145, %s147
      %p151 = scmp.eq.s32.totalorder %s22, 0
      %p152 = por %p150, %p151
      %p153 = scmp.ne.s32.totalorder %s145, %s147
      %p154 = scmp.eq.s32.totalorder %s27, 1
      %p155 = por %p153, %p154
      %p156 = scmp.ne.s32.totalorder %s147, %s148
      %p157 = scmp.eq.s32.totalorder %s27, 0
      %p158 = por %p156, %p157
      %p159 = scmp.ne.s32.totalorder %s147, %s148
      %p160 = scmp.eq.s32.totalorder %s28, 1
      %p161 = por %p159, %p160
      %p163 = scmp.ne.s32.totalorder %s148, %s162
      %p164 = scmp.eq.s32.totalorder %s28, 0
      %p165 = por %p163, %p164
      %s166 = ssub.s32 %s22, %s29
      %p167 = scmp.eq.s32.totalorder %s166, 0
      %s169 = sadd.s32 %s168, 1
      %s170 = scalar_select %p167, %s168, %s169
      %p173 = pneg %p167
      %p174 = scmp.eq.s32.totalorder %s22, 1
      %p175 = por %p173, %p174
      %p176 = scmp.ne.s32.totalorder %s168, %s171
      %p177 = scmp.eq.s32.totalorder %s22, 0
      %p178 = por %p176, %p177
      %p179 = scmp.ne.s32.totalorder %s168, %s171
      %p180 = scmp.eq.s32.totalorder %s27, 1
      %p181 = por %p179, %p180
      %p182 = scmp.ne.s32.totalorder %s171, %s172
      %p183 = scmp.eq.s32.totalorder %s27, 0
      %p184 = por %p182, %p183
      %p185 = scmp.ne.s32.totalorder %s171, %s172
      %p186 = scmp.eq.s32.totalorder %s28, 1
      %p187 = por %p185, %p186
      %p189 = scmp.ne.s32.totalorder %s172, %s188
      %p190 = scmp.eq.s32.totalorder %s28, 0
      %p191 = por %p189, %p190
      %p192 = scmp.le.s32.totalorder 1, %s22
      %p193 = scmp.lt.s32.totalorder %s22, 3
      %p194 = pnand %p192, %p193
      %p195 = pneg %p194
      // Predicated region
      $region9: #{tpu_custom_call.1} parent=5 // pred_check
        _
      $region10: #{tpu_custom_call.1} parent=5 // pred_check_branch
        %197 = sbr.rel (%p194) target = $region12
      $region11: #{tpu_custom_call.1} parent=5 // pred_region
        %s198 = ssub.s32 %s22, 1
        // Predicated region
        $region13: #{tpu_custom_call.1} parent=11 // pred_check
          %p199 = pneg %p95
        $region14: #{tpu_custom_call.1} parent=11 // pred_check_branch
          %201 = sbr.rel (%p199) target = $region16
        $region15: #{tpu_custom_call.1} parent=11 // pred_region
          %s203 = ssub.s32 512, 512
          %204 = vsyncadd [#allocation6], %s203
          %s205 = sshll.u32 [#allocation7], 4
          %s206 = int_to_ptr.vmem [resolvable:$true] %s205
          %211 = dma.hbm_to_vmem [thread:$0]  %s2, 512, %s206, [#allocation6], 128, 128, 8
        $region16: #{tpu_custom_call.1} parent=11 // pred_fallthru
          _
        // Predicated region
        $region17: #{tpu_custom_call.1} parent=11 // pred_check
          %p212 = pneg %p116
        $region18: #{tpu_custom_call.1} parent=11 // pred_check_branch
          %214 = sbr.rel (%p212) target = $region20
        $region19: #{tpu_custom_call.1} parent=11 // pred_region
          _
        $region20: #{tpu_custom_call.1} parent=11 // pred_fallthru
          _
        // Predicated region
        $region21: #{tpu_custom_call.1} parent=11 // pred_check
          %p215 = pneg %p137
        $region22: #{tpu_custom_call.1} parent=11 // pred_check_branch
          %217 = sbr.rel (%p215) target = $region24
        $region23: #{tpu_custom_call.1} parent=11 // pred_region
          %s219 = ssub.s32 256, 256
          %220 = vsyncadd [#allocation9], %s219
          %s221 = sshll.u32 [#allocation8], 4
          %s222 = int_to_ptr.vmem [resolvable:$true] %s221
          %227 = dma.hbm_to_vmem [thread:$0]  %s4, 256, %s222, [#allocation9], 128, 128, 8
        $region24: #{tpu_custom_call.1} parent=11 // pred_fallthru
          _
        // Predicated region
        $region25: #{tpu_custom_call.1} parent=11 // pred_check
          %p228 = pneg %p158
        $region26: #{tpu_custom_call.1} parent=11 // pred_check_branch
          %230 = sbr.rel (%p228) target = $region28
        $region27: #{tpu_custom_call.1} parent=11 // pred_region
          _
        $region28: #{tpu_custom_call.1} parent=11 // pred_fallthru
          _
      $region12: #{tpu_custom_call.1} parent=5 // pred_fallthru
        _
      %p231 = scmp.lt.s32.totalorder %s22, 2
      // Predicated region
      $region29: #{tpu_custom_call.1} parent=5 // pred_check
        %p232 = pneg %p231
      $region30: #{tpu_custom_call.1} parent=5 // pred_check_branch
        %234 = sbr.rel (%p232) target = $region32
      $region31: #{tpu_custom_call.1} parent=5 // pred_region
        // Predicated region
        $region33: #{tpu_custom_call.1} parent=31 // pred_check
          %p235 = pneg %p42
        $region34: #{tpu_custom_call.1} parent=31 // pred_check_branch
          %237 = sbr.rel (%p235) target = $region36
        $region35: #{tpu_custom_call.1} parent=31 // pred_region
          %s238 = sand.u32 %s32, 1
          %s239 = scalar_lea.sflag [#allocation3], %s238
          %s240 = sand.u32 %s32, 1
          %s241 = smul.addr %s240, 8
          %s242 = scalar_lea.vmem [#allocation2], %s241
          %s244 = ssub.s32 128, 128
          %245 = vsyncadd %s239, %s244
          %s246 = smul.addr %s22, 128
          %s247 = scalar_lea.hbm %s0, %s246
          %s249 = sshll.u32 %s242, 4
          %s250 = int_to_ptr.vmem [resolvable:$true] %s249
          %252 = dma.hbm_to_vmem [thread:$0]  %s247, 128, %s250, %s239
        $region36: #{tpu_custom_call.1} parent=31 // pred_fallthru
          _
        // Predicated region
        $region37: #{tpu_custom_call.1} parent=31 // pred_check
          %p253 = pneg %p68
        $region38: #{tpu_custom_call.1} parent=31 // pred_check_branch
          %255 = sbr.rel (%p253) target = $region40
        $region39: #{tpu_custom_call.1} parent=31 // pred_region
          %s256 = sand.u32 %s22, 1
          %s257 = scalar_lea.sflag [#allocation6], %s256
          %s258 = sand.u32 %s58, 1
          %s259 = smul.addr %s258, 8
          %s260 = scalar_lea.vmem [#allocation5], %s259
          %s262 = ssub.s32 128, 128
          %263 = vsyncadd %s257, %s262
          %s264 = smul.addr %s22, 128
          %s265 = scalar_lea.hbm %s1, %s264
          %s267 = sshll.u32 %s260, 4
          %s268 = int_to_ptr.vmem [resolvable:$true] %s267
          %270 = dma.hbm_to_vmem [thread:$0]  %s265, 128, %s268, %s257
        $region40: #{tpu_custom_call.1} parent=31 // pred_fallthru
          _
      $region32: #{tpu_custom_call.1} parent=5 // pred_fallthru
        _
      %p271 = scmp.le.s32.totalorder 1, %s22
      %p272 = scmp.lt.s32.totalorder %s22, 3
      %p273 = pnand %p271, %p272
      %p274 = pneg %p273
      // Predicated region
      $region41: #{tpu_custom_call.1} parent=5 // pred_check
        _
      $region42: #{tpu_custom_call.1} parent=5 // pred_check_branch
        %276 = sbr.rel (%p273) target = $region44
      $region43: #{tpu_custom_call.1} parent=5 // pred_region
        %s277 = ssub.s32 %s22, 1
        %s278 = sand.u32 %s35, 1
        %s279 = scalar_lea.sflag [#allocation3], %s278
        %s280 = sand.u32 %s35, 1
        %s281 = smul.addr %s280, 8
        %s282 = scalar_lea.vmem [#allocation2], %s281
        // Predicated region
        $region45: #{tpu_custom_call.1} parent=43 // pred_check
          %p283 = pneg %p48
        $region46: #{tpu_custom_call.1} parent=43 // pred_check_branch
          %285 = sbr.rel (%p283) target = $region48
        $region47: #{tpu_custom_call.1} parent=43 // pred_region
          %286 = dma.done %s279, 128
        $region48: #{tpu_custom_call.1} parent=43 // pred_fallthru
          _
        %s287 = sand.u32 %s27, 1
        %s288 = scalar_lea.sflag [#allocation6], %s287
        %s289 = sand.u32 %s61, 1
        %s290 = smul.addr %s289, 8
        %s291 = scalar_lea.vmem [#allocation5], %s290
        // Predicated region
        $region49: #{tpu_custom_call.1} parent=43 // pred_check
          %p292 = pneg %p74
        $region50: #{tpu_custom_call.1} parent=43 // pred_check_branch
          %294 = sbr.rel (%p292) target = $region52
        $region51: #{tpu_custom_call.1} parent=43 // pred_region
          %295 = dma.done %s288, 128
        $region52: #{tpu_custom_call.1} parent=43 // pred_fallthru
          _
        // Predicated region
        $region53: #{tpu_custom_call.1} parent=43 // pred_check
          %p296 = pneg %p95
        $region54: #{tpu_custom_call.1} parent=43 // pred_check_branch
          %298 = sbr.rel (%p296) target = $region56
        $region55: #{tpu_custom_call.1} parent=43 // pred_region
          %299 = dma.done [#allocation6], 512
        $region56: #{tpu_custom_call.1} parent=43 // pred_fallthru
          _
        // Predicated region
        $region57: #{tpu_custom_call.1} parent=43 // pred_check
          %p300 = pneg %p137
        $region58: #{tpu_custom_call.1} parent=43 // pred_check_branch
          %302 = sbr.rel (%p300) target = $region60
        $region59: #{tpu_custom_call.1} parent=43 // pred_region
          %303 = dma.done [#allocation9], 256
        $region60: #{tpu_custom_call.1} parent=43 // pred_fallthru
          _
        %s304 = sand.u32 %s35, 1
        %s305 = scalar_lea.sflag [#allocation3], %s304
        %s306 = sand.u32 %s35, 1
        %s307 = smul.addr %s306, 8
        %s308 = scalar_lea.vmem [#allocation2], %s307
        %p309 = pneg %p48
        %p310 = pneg %p45
        %s311 = sand.u32 %s27, 1
        %s312 = scalar_lea.sflag [#allocation6], %s311
        %s313 = sand.u32 %s61, 1
        %s314 = smul.addr %s313, 8
        %s315 = scalar_lea.vmem [#allocation5], %s314
        %p316 = pneg %p74
        %p317 = pneg %p71
        %p318 = pneg %p95
        %p319 = pneg %p92
        %p320 = pneg %p116
        %p321 = pneg %p113
        %p322 = pneg %p137
        %p323 = pneg %p134
        %p324 = pneg %p158
        %p325 = pneg %p155
        %p326 = pneg %p184
        %p327 = pneg %p181
        %s328 = sand.u32 %s171, 1
        %s329 = scalar_lea.sflag [#allocation4], %s328
        %s330 = sand.u32 %s171, 1
        %s331 = smul.addr %s330, 8
        %s332 = scalar_lea.vmem [#allocation10], %s331
        %v333 = vld [vmem:[%s282] sm:$0xff]
        %v334 = vld [vmem:[#allocation7] sm:$0xff]
        %v335 = vld [vmem:[#allocation7 + $0x8] sm:$0xff]
        %v336 = vld [vmem:[#allocation7 + $0x10] sm:$0xff]
        %v337 = vld [vmem:[#allocation7 + $0x18] sm:$0xff]
        %v338 = vld [vmem:[%s3] sm:$0x1]
        %v340 = vlaneseq
        %v341 = vshrl.u32 %v340, 7
        %v342 = vsub.s32 0, %v341
        %v343 = vrot.slane %v338, %v342
        %vm345 = vcmask 261120
        %v347 = vsel %vm345, %v333, 0
        %349 = vmatprep.subr.mxu0 0.0
        %350 = vmatpush1.msra.mxu0 %v334
        %351 = vmatprep.subr.mxu0 0.0
        %352 = vmatpush1.msra.mxu0 %v335
        %353 = vmatprep.subr.mxu0 0.0
        %354 = vmatpush1.msra.mxu0 %v336
        %355 = vmatprep.subr.mxu0 0.0
        %356 = vmatpush1.msra.mxu0 %v337
        %357 = vmatprep.subr.mxu0 0.0
        %358 = vmatpush1.msra.mxu0 0.0
        %359 = vmatprep.subr.mxu0 0.0
        %360 = vmatpush1.msra.mxu0 0.0
        %361 = vmatprep.subr.mxu0 0.0
        %362 = vmatpush1.msra.mxu0 0.0
        %363 = vmatprep.subr.mxu0 0.0
        %364 = vmatpush1.msra.mxu0 0.0
        %365 = vmatprep.subr.mxu0 0.0
        %366 = vmatpush1.msra.mxu0 0.0
        %367 = vmatprep.subr.mxu0 0.0
        %368 = vmatpush1.msra.mxu0 0.0
        %369 = vmatprep.subr.mxu0 0.0
        %370 = vmatpush1.msra.mxu0 0.0
        %371 = vmatprep.subr.mxu0 0.0
        %372 = vmatpush1.msra.mxu0 0.0
        %373 = vmatprep.subr.mxu0 0.0
        %374 = vmatpush1.msra.mxu0 0.0
        %375 = vmatprep.subr.mxu0 0.0
        %376 = vmatpush1.msra.mxu0 0.0
        %377 = vmatprep.subr.mxu0 0.0
        %378 = vmatpush1.msra.mxu0 0.0
        %379 = vmatprep.subr.mxu0 0.0
        %380 = vmatpush1.msra.mxu0 0.0
        %381 = vmatprep.subr.mxu0 0.0
        %382 = vmatpush1.msra.mxu0 0.0
        %383 = vmatprep.subr.mxu0 0.0
        %384 = vmatpush1.msra.mxu0 0.0
        %385 = vmatprep.subr.mxu0 0.0
        %386 = vmatpush1.msra.mxu0 0.0
        %387 = vmatprep.subr.mxu0 0.0
        %388 = vmatpush1.msra.mxu0 0.0
        %389 = vmatprep.subr.mxu0 0.0
        %390 = vmatpush1.msra.mxu0 0.0
        %391 = vmatprep.subr.mxu0 0.0
        %392 = vmatpush1.msra.mxu0 0.0
        %393 = vmatprep.subr.mxu0 0.0
        %394 = vmatpush1.msra.mxu0 0.0
        %395 = vmatprep.subr.mxu0 0.0
        %396 = vmatpush1.msra.mxu0 0.0
        %397 = vmatprep.subr.mxu0 0.0
        %398 = vmatpush1.msra.mxu0 0.0
        %399 = vmatprep.subr.mxu0 0.0
        %400 = vmatpush1.msra.mxu0 0.0
        %401 = vmatprep.subr.mxu0 0.0
        %402 = vmatpush1.msra.mxu0 0.0
        %403 = vmatprep.subr.mxu0 0.0
        %404 = vmatpush1.msra.mxu0 0.0
        %405 = vmatprep.subr.mxu0 0.0
        %406 = vmatpush1.msra.mxu0 0.0
        %407 = vmatprep.subr.mxu0 0.0
        %408 = vmatpush1.msra.mxu0 0.0
        %409 = vmatprep.subr.mxu0 0.0
        %410 = vmatpush1.msra.mxu0 0.0
        %411 = vmatprep.subr.mxu0 0.0
        %412 = vmatpush1.msra.mxu0 0.0
        %413 = vmatprep.mubr.f32.mxu0 0.0
        %414 = vmatmul.mubr.f32.gmra.mrb[0].mxu0 %v347
        %v415 = vpop.f32.mrb[0].mxu0
        %v416 = vadd.f32 %v343, %v415
        %v417 = vpop.f32.mrb[0].mxu0
        %418 = vdwg.mxu0
        %v419 = vld [vmem:[%s291] sm:$0xff]
        %v420 = vmax.f32 %v419, 0.0
        %v421 = vld [vmem:[#allocation8] sm:$0xff]
        %v422 = vld [vmem:[#allocation8 + $0x8] sm:$0xff]
        %v423 = vld [vmem:[%s5] sm:$0x1]
        %v425 = vlaneseq
        %v426 = vshrl.u32 %v425, 7
        %v427 = vsub.s32 0, %v426
        %v428 = vrot.slane %v423, %v427
        %vm430 = vcmask 130048
        %v432 = vsel %vm430, %v420, 0
        %434 = vmatprep.subr.mxu0 0.0
        %435 = vmatpush1.msra.mxu0 %v421
        %436 = vmatprep.subr.mxu0 0.0
        %437 = vmatpush1.msra.mxu0 %v422
        %438 = vmatprep.subr.mxu0 0.0
        %439 = vmatpush1.msra.mxu0 0.0
        %440 = vmatprep.subr.mxu0 0.0
        %441 = vmatpush1.msra.mxu0 0.0
        %442 = vmatprep.subr.mxu0 0.0
        %443 = vmatpush1.msra.mxu0 0.0
        %444 = vmatprep.subr.mxu0 0.0
        %445 = vmatpush1.msra.mxu0 0.0
        %446 = vmatprep.subr.mxu0 0.0
        %447 = vmatpush1.msra.mxu0 0.0
        %448 = vmatprep.subr.mxu0 0.0
        %449 = vmatpush1.msra.mxu0 0.0
        %450 = vmatprep.subr.mxu0 0.0
        %451 = vmatpush1.msra.mxu0 0.0
        %452 = vmatprep.subr.mxu0 0.0
        %453 = vmatpush1.msra.mxu0 0.0
        %454 = vmatprep.subr.mxu0 0.0
        %455 = vmatpush1.msra.mxu0 0.0
        %456 = vmatprep.subr.mxu0 0.0
        %457 = vmatpush1.msra.mxu0 0.0
        %458 = vmatprep.subr.mxu0 0.0
        %459 = vmatpush1.msra.mxu0 0.0
        %460 = vmatprep.subr.mxu0 0.0
        %461 = vmatpush1.msra.mxu0 0.0
        %462 = vmatprep.subr.mxu0 0.0
        %463 = vmatpush1.msra.mxu0 0.0
        %464 = vmatprep.subr.mxu0 0.0
        %465 = vmatpush1.msra.mxu0 0.0
        %466 = vmatprep.subr.mxu0 0.0
        %467 = vmatpush1.msra.mxu0 0.0
        %468 = vmatprep.subr.mxu0 0.0
        %469 = vmatpush1.msra.mxu0 0.0
        %470 = vmatprep.subr.mxu0 0.0
        %471 = vmatpush1.msra.mxu0 0.0
        %472 = vmatprep.subr.mxu0 0.0
        %473 = vmatpush1.msra.mxu0 0.0
        %474 = vmatprep.subr.mxu0 0.0
        %475 = vmatpush1.msra.mxu0 0.0
        %476 = vmatprep.subr.mxu0 0.0
        %477 = vmatpush1.msra.mxu0 0.0
        %478 = vmatprep.subr.mxu0 0.0
        %479 = vmatpush1.msra.mxu0 0.0
        %480 = vmatprep.subr.mxu0 0.0
        %481 = vmatpush1.msra.mxu0 0.0
        %482 = vmatprep.subr.mxu0 0.0
        %483 = vmatpush1.msra.mxu0 0.0
        %484 = vmatprep.subr.mxu0 0.0
        %485 = vmatpush1.msra.mxu0 0.0
        %486 = vmatprep.subr.mxu0 0.0
        %487 = vmatpush1.msra.mxu0 0.0
        %488 = vmatprep.subr.mxu0 0.0
        %489 = vmatpush1.msra.mxu0 0.0
        %490 = vmatprep.subr.mxu0 0.0
        %491 = vmatpush1.msra.mxu0 0.0
        %492 = vmatprep.subr.mxu0 0.0
        %493 = vmatpush1.msra.mxu0 0.0
        %494 = vmatprep.subr.mxu0 0.0
        %495 = vmatpush1.msra.mxu0 0.0
        %496 = vmatprep.subr.mxu0 0.0
        %497 = vmatpush1.msra.mxu0 0.0
        %498 = vmatprep.mubr.f32.mxu0 0.0
        %499 = vmatmul.mubr.f32.gmra.mrb[0].mxu0 %v432
        %v500 = vpop.f32.mrb[0].mxu0
        %v501 = vadd.f32 %v428, %v500
        %v502 = vpop.f32.mrb[0].mxu0
        %503 = vdwg.mxu0
        %v504 = vadd.f32 %v501, 1.0
        %v505 = vmul.f32 %v416, %v504
        %v506 = vmax.f32 %v505, 0.0
        %507 = vst.msk [vmem:[%s332] sm:$0xff] %vm345, %v506
        %s508 = sand.u32 %s171, 1
        %s509 = scalar_lea.sflag [#allocation4], %s508
        %s510 = sand.u32 %s171, 1
        %s511 = smul.addr %s510, 8
        %s512 = scalar_lea.vmem [#allocation10], %s511
        // Predicated region
        $region61: #{tpu_custom_call.1} parent=43 // pred_check
          %p513 = pneg %p181
        $region62: #{tpu_custom_call.1} parent=43 // pred_check_branch
          %515 = sbr.rel (%p513) target = $region64
        $region63: #{tpu_custom_call.1} parent=43 // pred_region
          %s517 = ssub.s32 128, 128
          %518 = vsyncadd %s509, %s517
          %s519 = smul.addr %s27, 128
          %s520 = scalar_lea.hbm %s6, %s519
          %s522 = sshll.u32 %s512, 4
          %s523 = int_to_ptr.vmem [resolvable:$true] %s522
          %525 = dma.vmem_to_hbm [thread:$0]  %s523, 128, %s520, %s509
        $region64: #{tpu_custom_call.1} parent=43 // pred_fallthru
          _
      $region44: #{tpu_custom_call.1} parent=5 // pred_fallthru
        _
      %p526 = scmp.le.s32.totalorder 2, %s22
      // Predicated region
      $region65: #{tpu_custom_call.1} parent=5 // pred_check
        %p527 = pneg %p526
      $region66: #{tpu_custom_call.1} parent=5 // pred_check_branch
        %529 = sbr.rel (%p527) target = $region68
      $region67: #{tpu_custom_call.1} parent=5 // pred_region
        %s530 = ssub.s32 %s22, 2
        // Predicated region
        $region69: #{tpu_custom_call.1} parent=67 // pred_check
          %p531 = pneg %p187
        $region70: #{tpu_custom_call.1} parent=67 // pred_check_branch
          %533 = sbr.rel (%p531) target = $region72
        $region71: #{tpu_custom_call.1} parent=67 // pred_region
          %s534 = sand.u32 %s172, 1
          %s535 = scalar_lea.sflag [#allocation4], %s534
          %s536 = sand.u32 %s172, 1
          %s537 = smul.addr %s536, 8
          %s538 = scalar_lea.vmem [#allocation10], %s537
          %539 = dma.done %s535, 128
        $region72: #{tpu_custom_call.1} parent=67 // pred_fallthru
          _
      $region68: #{tpu_custom_call.1} parent=5 // pred_fallthru
        _
    $region6: #{tpu_custom_call.1} parent=1 // loop_footer
      %s26 = sadd.s32 1, %s22
    $region7: #{tpu_custom_call.1} parent=1 // loop_footer_branch
      %21 = sbr.rel target = $region3
    $region8: #{tpu_custom_call.1} parent=1 // loop_exit
      _
    %540 = vsyncpa [#allocation3], 1
    %s541 = scalar_lea.sflag [#allocation3], 1
    %542 = vsyncpa %s541, 1
    %543 = vsyncpa [#allocation6], 1
    %s544 = scalar_lea.sflag [#allocation6], 1
    %545 = vsyncpa %s544, 1
    %546 = vsyncpa [#allocation9], 1
    %547 = vsyncpa [#allocation4], 1
    %s548 = scalar_lea.sflag [#allocation4], 1
    %549 = vsyncpa %s548, 1

// kernel: tpu_custom_call.1
$region0: #{tpu_custom_call.1}
  #allocation0 [shape = 'u32[]', space=smem, size = 0x4, offset = 0x4, fixed_abs, tag = 'smem constant byte address 0x4 - core index']
  #allocation1 [shape = 'u32[144,128]{1,0:T(1,128)}', space=vmem, size = 0x12000, scoped, tag = 'internal scratch']
  %s0 = inlined_call_operand.hbm [shape: f32[10,32], index: 0, kind: input, shape index: {}]
  %s1 = inlined_call_operand.hbm [shape: f32[10,16], index: 1, kind: input, shape index: {}]
  %s2 = inlined_call_operand.hbm [shape: f32[32,32], index: 2, kind: input, shape index: {}]
  %s3 = inlined_call_operand.vmem [shape: f32[1,32], index: 3, kind: input, shape index: {}]
  %s4 = inlined_call_operand.hbm [shape: f32[16,32], index: 4, kind: input, shape index: {}]
  %s5 = inlined_call_operand.vmem [shape: f32[1,32], index: 5, kind: input, shape index: {}]
  %s6 = inlined_call_operand.hbm [shape: f32[10,32], index: 6, kind: output, shape index: {}]
  %s7 = sld [smem:[#allocation0]]
  $region73: #{tpu_custom_call.1} parent=0
    _
  %s9 = ssub.s32 1, %s7
  %s10 = scalar_select 0, %s9, %s7
  $region1: #{tpu_custom_call.1} parent=0
    #allocation2 [shape = 'u8[8192]{0}', space=vmem, size = 0x2000, scoped, tag = 'input window, operand 0']
    #allocation3 [shape = 's32[2]{0}', space=sflag, size = 0x8, scoped, tag = 'scoped memory for tpu_custom_call.1']
    #allocation4 [shape = 's32[2]{0}', space=sflag, size = 0x8, scoped, tag = 'scoped memory for tpu_custom_call.1']
    #allocation5 [shape = 'u8[8192]{0}', space=vmem, size = 0x2000, scoped, tag = 'input window, operand 1']
    #allocation6 [shape = 's32[2]{0}', space=sflag, size = 0x8, scoped, tag = 'scoped memory for tpu_custom_call.1']
    #allocation7 [shape = 'u8[16384]{0}', space=vmem, size = 0x4000, scoped, tag = 'input window, operand 2, single buffered']
    #allocation8 [shape = 'u8[8192]{0}', space=vmem, size = 0x2000, scoped, tag = 'input window, operand 4, single buffered']
    #allocation9 [shape = 's32[1]{0}', space=sflag, size = 0x4, scoped, tag = 'scoped memory for tpu_custom_call.1']
    #allocation10 [shape = 'u8[8192]{0}', space=vmem, size = 0x2000, scoped, tag = 'output window, operand 0']
    %11 = vsyncpa [#allocation3], 0
    %s12 = scalar_lea.sflag [#allocation3], 1
    %13 = vsyncpa %s12, 0
    %14 = vsyncpa [#allocation6], 0
    %s15 = scalar_lea.sflag [#allocation6], 1
    %16 = vsyncpa %s15, 0
    %17 = vsyncpa [#allocation9], 0
    %18 = vsyncpa [#allocation4], 0
    %s19 = scalar_lea.sflag [#allocation4], 1
    %20 = vsyncpa %s19, 0
    loop: start=0, step=1, limit=4
    $region2: #{tpu_custom_call.1} parent=1 // loop_pre_header
      _
    $region3: #{tpu_custom_call.1} parent=1 // loop_header
      %s22 = sphi 0, %s26
      %p23 = scmp.ge.s32.totalorder %s22, 4
      %s32 = sphi 0, %s34
      %s35 = sphi 0, %s32
      %s36 = sphi 0, %s35
      %s52 = sphi 0, %s36
      %s58 = sphi 0, %s60
      %s61 = sphi 0, %s58
      %s62 = sphi 0, %s61
      %s78 = sphi 0, %s62
      %s82 = sphi 0, %s82
      %s84 = sphi 0, %s82
      %s85 = sphi 0, %s84
      %s99 = sphi 0, %s85
      %s103 = sphi 0, %s103
      %s105 = sphi 0, %s103
      %s106 = sphi 0, %s105
      %s120 = sphi 0, %s106
      %s124 = sphi 0, %s124
      %s126 = sphi 0, %s124
      %s127 = sphi 0, %s126
      %s141 = sphi 0, %s127
      %s145 = sphi 0, %s145
      %s147 = sphi 0, %s145
      %s148 = sphi 0, %s147
      %s162 = sphi 0, %s148
      %s168 = sphi 0, %s170
      %s171 = sphi 0, %s168
      %s172 = sphi 0, %s171
      %s188 = sphi 0, %s172
    $region4: #{tpu_custom_call.1} parent=1 // loop_header_branch
      %25 = sbr.rel (%p23) target = $region8
    $region5: #{tpu_custom_call.1} parent=1 // loop_body
      %s27 = ssub.s32 %s22, 1
      %s28 = ssub.s32 %s22, 2
      %s29 = sadd.s32 %s22, 1
      %s30 = ssub.s32 %s22, %s29
      %p31 = scmp.eq.s32.totalorder %s30, 0
      %s33 = sadd.s32 %s32, 1
      %s34 = scalar_select %p31, %s32, %s33
      %p37 = pneg %p31
      %p38 = scmp.eq.s32.totalorder %s22, 1
      %p39 = por %p37, %p38
      %p40 = scmp.ne.s32.totalorder %s32, %s35
      %p41 = scmp.eq.s32.totalorder %s22, 0
      %p42 = por %p40, %p41
      %p43 = scmp.ne.s32.totalorder %s32, %s35
      %p44 = scmp.eq.s32.totalorder %s27, 1
      %p45 = por %p43, %p44
      %p46 = scmp.ne.s32.totalorder %s35, %s36
      %p47 = scmp.eq.s32.totalorder %s27, 0
      %p48 = por %p46, %p47
      %p49 = scmp.ne.s32.totalorder %s35, %s36
      %p50 = scmp.eq.s32.totalorder %s28, 1
      %p51 = por %p49, %p50
      %p53 = scmp.ne.s32.totalorder %s36, %s52
      %p54 = scmp.eq.s32.totalorder %s28, 0
      %p55 = por %p53, %p54
      %s56 = ssub.s32 %s22, %s29
      %p57 = scmp.eq.s32.totalorder %s56, 0
      %s59 = sadd.s32 %s58, 1
      %s60 = scalar_select %p57, %s58, %s59
      %p63 = pneg %p57
      %p64 = scmp.eq.s32.totalorder %s22, 1
      %p65 = por %p63, %p64
      %p66 = scmp.ne.s32.totalorder %s58, %s61
      %p67 = scmp.eq.s32.totalorder %s22, 0
      %p68 = por %p66, %p67
      %p69 = scmp.ne.s32.totalorder %s58, %s61
      %p70 = scmp.eq.s32.totalorder %s27, 1
      %p71 = por %p69, %p70
      %p72 = scmp.ne.s32.totalorder %s61, %s62
      %p73 = scmp.eq.s32.totalorder %s27, 0
      %p74 = por %p72, %p73
      %p75 = scmp.ne.s32.totalorder %s61, %s62
      %p76 = scmp.eq.s32.totalorder %s28, 1
      %p77 = por %p75, %p76
      %p79 = scmp.ne.s32.totalorder %s62, %s78
      %p80 = scmp.eq.s32.totalorder %s28, 0
      %p81 = por %p79, %p80
      %s83 = sadd.s32 %s82, 1
      %p86 = scmp.eq.s32.totalorder %s22, 1
      %p87 = scmp.ne.s32.totalorder %s82, %s84
      %p88 = scmp.eq.s32.totalorder %s22, 0
      %p89 = por %p87, %p88
      %p90 = scmp.ne.s32.totalorder %s82, %s84
      %p91 = scmp.eq.s32.totalorder %s27, 1
      %p92 = por %p90, %p91
      %p93 = scmp.ne.s32.totalorder %s84, %s85
      %p94 = scmp.eq.s32.totalorder %s27, 0
      %p95 = por %p93, %p94
      %p96 = scmp.ne.s32.totalorder %s84, %s85
      %p97 = scmp.eq.s32.totalorder %s28, 1
      %p98 = por %p96, %p97
      %p100 = scmp.ne.s32.totalorder %s85, %s99
      %p101 = scmp.eq.s32.totalorder %s28, 0
      %p102 = por %p100, %p101
      %s104 = sadd.s32 %s103, 1
      %p107 = scmp.eq.s32.totalorder %s22, 1
      %p108 = scmp.ne.s32.totalorder %s103, %s105
      %p109 = scmp.eq.s32.totalorder %s22, 0
      %p110 = por %p108, %p109
      %p111 = scmp.ne.s32.totalorder %s103, %s105
      %p112 = scmp.eq.s32.totalorder %s27, 1
      %p113 = por %p111, %p112
      %p114 = scmp.ne.s32.totalorder %s105, %s106
      %p115 = scmp.eq.s32.totalorder %s27, 0
      %p116 = por %p114, %p115
      %p117 = scmp.ne.s32.totalorder %s105, %s106
      %p118 = scmp.eq.s32.totalorder %s28, 1
      %p119 = por %p117, %p118
      %p121 = scmp.ne.s32.totalorder %s106, %s120
      %p122 = scmp.eq.s32.totalorder %s28, 0
      %p123 = por %p121, %p122
      %s125 = sadd.s32 %s124, 1
      %p128 = scmp.eq.s32.totalorder %s22, 1
      %p129 = scmp.ne.s32.totalorder %s124, %s126
      %p130 = scmp.eq.s32.totalorder %s22, 0
      %p131 = por %p129, %p130
      %p132 = scmp.ne.s32.totalorder %s124, %s126
      %p133 = scmp.eq.s32.totalorder %s27, 1
      %p134 = por %p132, %p133
      %p135 = scmp.ne.s32.totalorder %s126, %s127
      %p136 = scmp.eq.s32.totalorder %s27, 0
      %p137 = por %p135, %p136
      %p138 = scmp.ne.s32.totalorder %s126, %s127
      %p139 = scmp.eq.s32.totalorder %s28, 1
      %p140 = por %p138, %p139
      %p142 = scmp.ne.s32.totalorder %s127, %s141
      %p143 = scmp.eq.s32.totalorder %s28, 0
      %p144 = por %p142, %p143
      %s146 = sadd.s32 %s145, 1
      %p149 = scmp.eq.s32.totalorder %s22, 1
      %p150 = scmp.ne.s32.totalorder %s145, %s147
      %p151 = scmp.eq.s32.totalorder %s22, 0
      %p152 = por %p150, %p151
      %p153 = scmp.ne.s32.totalorder %s145, %s147
      %p154 = scmp.eq.s32.totalorder %s27, 1
      %p155 = por %p153, %p154
      %p156 = scmp.ne.s32.totalorder %s147, %s148
      %p157 = scmp.eq.s32.totalorder %s27, 0
      %p158 = por %p156, %p157
      %p159 = scmp.ne.s32.totalorder %s147, %s148
      %p160 = scmp.eq.s32.totalorder %s28, 1
      %p161 = por %p159, %p160
      %p163 = scmp.ne.s32.totalorder %s148, %s162
      %p164 = scmp.eq.s32.totalorder %s28, 0
      %p165 = por %p163, %p164
      %s166 = ssub.s32 %s22, %s29
      %p167 = scmp.eq.s32.totalorder %s166, 0
      %s169 = sadd.s32 %s168, 1
      %s170 = scalar_select %p167, %s168, %s169
      %p173 = pneg %p167
      %p174 = scmp.eq.s32.totalorder %s22, 1
      %p175 = por %p173, %p174
      %p176 = scmp.ne.s32.totalorder %s168, %s171
      %p177 = scmp.eq.s32.totalorder %s22, 0
      %p178 = por %p176, %p177
      %p179 = scmp.ne.s32.totalorder %s168, %s171
      %p180 = scmp.eq.s32.totalorder %s27, 1
      %p181 = por %p179, %p180
      %p182 = scmp.ne.s32.totalorder %s171, %s172
      %p183 = scmp.eq.s32.totalorder %s27, 0
      %p184 = por %p182, %p183
      %p185 = scmp.ne.s32.totalorder %s171, %s172
      %p186 = scmp.eq.s32.totalorder %s28, 1
      %p187 = por %p185, %p186
      %p189 = scmp.ne.s32.totalorder %s172, %s188
      %p190 = scmp.eq.s32.totalorder %s28, 0
      %p191 = por %p189, %p190
      %p192 = scmp.le.s32.totalorder 1, %s22
      %p193 = scmp.lt.s32.totalorder %s22, 3
      %p194 = pnand %p192, %p193
      %p195 = pneg %p194
      // Predicated region
      $region9: #{tpu_custom_call.1} parent=5 // pred_check
        _
      $region10: #{tpu_custom_call.1} parent=5 // pred_check_branch
        %197 = sbr.rel (%p194) target = $region12
      $region11: #{tpu_custom_call.1} parent=5 // pred_region
        %s198 = ssub.s32 %s22, 1
        // Predicated region
        $region13: #{tpu_custom_call.1} parent=11 // pred_check
          %p199 = pneg %p95
        $region14: #{tpu_custom_call.1} parent=11 // pred_check_branch
          %201 = sbr.rel (%p199) target = $region16
        $region15: #{tpu_custom_call.1} parent=11 // pred_region
          %s203 = ssub.s32 512, 512
          %204 = vsyncadd [#allocation6], %s203
          %s205 = sshll.u32 [#allocation7], 4
          %s206 = int_to_ptr.vmem [resolvable:$true] %s205
          %211 = dma.hbm_to_vmem [thread:$0]  %s2, 512, %s206, [#allocation6], 128, 128, 8
        $region16: #{tpu_custom_call.1} parent=11 // pred_fallthru
          _
        // Predicated region
        $region17: #{tpu_custom_call.1} parent=11 // pred_check
          %p212 = pneg %p116
        $region18: #{tpu_custom_call.1} parent=11 // pred_check_branch
          %214 = sbr.rel (%p212) target = $region20
        $region19: #{tpu_custom_call.1} parent=11 // pred_region
          _
        $region20: #{tpu_custom_call.1} parent=11 // pred_fallthru
          _
        // Predicated region
        $region21: #{tpu_custom_call.1} parent=11 // pred_check
          %p215 = pneg %p137
        $region22: #{tpu_custom_call.1} parent=11 // pred_check_branch
          %217 = sbr.rel (%p215) target = $region24
        $region23: #{tpu_custom_call.1} parent=11 // pred_region
          %s219 = ssub.s32 256, 256
          %220 = vsyncadd [#allocation9], %s219
          %s221 = sshll.u32 [#allocation8], 4
          %s222 = int_to_ptr.vmem [resolvable:$true] %s221
          %227 = dma.hbm_to_vmem [thread:$0]  %s4, 256, %s222, [#allocation9], 128, 128, 8
        $region24: #{tpu_custom_call.1} parent=11 // pred_fallthru
          _
        // Predicated region
        $region25: #{tpu_custom_call.1} parent=11 // pred_check
          %p228 = pneg %p158
        $region26: #{tpu_custom_call.1} parent=11 // pred_check_branch
          %230 = sbr.rel (%p228) target = $region28
        $region27: #{tpu_custom_call.1} parent=11 // pred_region
          _
        $region28: #{tpu_custom_call.1} parent=11 // pred_fallthru
          _
      $region12: #{tpu_custom_call.1} parent=5 // pred_fallthru
        _
      %p231 = scmp.lt.s32.totalorder %s22, 2
      // Predicated region
      $region29: #{tpu_custom_call.1} parent=5 // pred_check
        %p232 = pneg %p231
      $region30: #{tpu_custom_call.1} parent=5 // pred_check_branch
        %234 = sbr.rel (%p232) target = $region32
      $region31: #{tpu_custom_call.1} parent=5 // pred_region
        // Predicated region
        $region33: #{tpu_custom_call.1} parent=31 // pred_check
          %p235 = pneg %p42
        $region34: #{tpu_custom_call.1} parent=31 // pred_check_branch
          %237 = sbr.rel (%p235) target = $region36
        $region35: #{tpu_custom_call.1} parent=31 // pred_region
          %s238 = sand.u32 %s32, 1
          %s239 = scalar_lea.sflag [#allocation3], %s238
          %s240 = sand.u32 %s32, 1
          %s241 = smul.addr %s240, 8
          %s242 = scalar_lea.vmem [#allocation2], %s241
          %s244 = ssub.s32 128, 128
          %245 = vsyncadd %s239, %s244
          %s246 = smul.addr %s22, 128
          %s247 = scalar_lea.hbm %s0, %s246
          %s249 = sshll.u32 %s242, 4
          %s250 = int_to_ptr.vmem [resolvable:$true] %s249
          %252 = dma.hbm_to_vmem [thread:$0]  %s247, 128, %s250, %s239
        $region36: #{tpu_custom_call.1} parent=31 // pred_fallthru
          _
        // Predicated region
        $region37: #{tpu_custom_call.1} parent=31 // pred_check
          %p253 = pneg %p68
        $region38: #{tpu_custom_call.1} parent=31 // pred_check_branch
          %255 = sbr.rel (%p253) target = $region40
        $region39: #{tpu_custom_call.1} parent=31 // pred_region
          %s256 = sand.u32 %s22, 1
          %s257 = scalar_lea.sflag [#allocation6], %s256
          %s258 = sand.u32 %s58, 1
          %s259 = smul.addr %s258, 8
          %s260 = scalar_lea.vmem [#allocation5], %s259
          %s262 = ssub.s32 128, 128
          %263 = vsyncadd %s257, %s262
          %s264 = smul.addr %s22, 128
          %s265 = scalar_lea.hbm %s1, %s264
          %s267 = sshll.u32 %s260, 4
          %s268 = int_to_ptr.vmem [resolvable:$true] %s267
          %270 = dma.hbm_to_vmem [thread:$0]  %s265, 128, %s268, %s257
        $region40: #{tpu_custom_call.1} parent=31 // pred_fallthru
          _
      $region32: #{tpu_custom_call.1} parent=5 // pred_fallthru
        _
      %p271 = scmp.le.s32.totalorder 1, %s22
      %p272 = scmp.lt.s32.totalorder %s22, 3
      %p273 = pnand %p271, %p272
      %p274 = pneg %p273
      // Predicated region
      $region41: #{tpu_custom_call.1} parent=5 // pred_check
        _
      $region42: #{tpu_custom_call.1} parent=5 // pred_check_branch
        %276 = sbr.rel (%p273) target = $region44
      $region43: #{tpu_custom_call.1} parent=5 // pred_region
        %s277 = ssub.s32 %s22, 1
        %s278 = sand.u32 %s35, 1
        %s279 = scalar_lea.sflag [#allocation3], %s278
        %s280 = sand.u32 %s35, 1
        %s281 = smul.addr %s280, 8
        %s282 = scalar_lea.vmem [#allocation2], %s281
        // Predicated region
        $region45: #{tpu_custom_call.1} parent=43 // pred_check
          %p283 = pneg %p48
        $region46: #{tpu_custom_call.1} parent=43 // pred_check_branch
          %285 = sbr.rel (%p283) target = $region48
        $region47: #{tpu_custom_call.1} parent=43 // pred_region
          %286 = dma.done %s279, 128
        $region48: #{tpu_custom_call.1} parent=43 // pred_fallthru
          _
        %s287 = sand.u32 %s27, 1
        %s288 = scalar_lea.sflag [#allocation6], %s287
        %s289 = sand.u32 %s61, 1
        %s290 = smul.addr %s289, 8
        %s291 = scalar_lea.vmem [#allocation5], %s290
        // Predicated region
        $region49: #{tpu_custom_call.1} parent=43 // pred_check
          %p292 = pneg %p74
        $region50: #{tpu_custom_call.1} parent=43 // pred_check_branch
          %294 = sbr.rel (%p292) target = $region52
        $region51: #{tpu_custom_call.1} parent=43 // pred_region
          %295 = dma.done %s288, 128
        $region52: #{tpu_custom_call.1} parent=43 // pred_fallthru
          _
        // Predicated region
        $region53: #{tpu_custom_call.1} parent=43 // pred_check
          %p296 = pneg %p95
        $region54: #{tpu_custom_call.1} parent=43 // pred_check_branch
          %298 = sbr.rel (%p296) target = $region56
        $region55: #{tpu_custom_call.1} parent=43 // pred_region
          %299 = dma.done [#allocation6], 512
        $region56: #{tpu_custom_call.1} parent=43 // pred_fallthru
          _
        // Predicated region
        $region57: #{tpu_custom_call.1} parent=43 // pred_check
          %p300 = pneg %p137
        $region58: #{tpu_custom_call.1} parent=43 // pred_check_branch
          %302 = sbr.rel (%p300) target = $region60
        $region59: #{tpu_custom_call.1} parent=43 // pred_region
          %303 = dma.done [#allocation9], 256
        $region60: #{tpu_custom_call.1} parent=43 // pred_fallthru
          _
        %s304 = sand.u32 %s35, 1
        %s305 = scalar_lea.sflag [#allocation3], %s304
        %s306 = sand.u32 %s35, 1
        %s307 = smul.addr %s306, 8
        %s308 = scalar_lea.vmem [#allocation2], %s307
        %p309 = pneg %p48
        %p310 = pneg %p45
        %s311 = sand.u32 %s27, 1
        %s312 = scalar_lea.sflag [#allocation6], %s311
        %s313 = sand.u32 %s61, 1
        %s314 = smul.addr %s313, 8
        %s315 = scalar_lea.vmem [#allocation5], %s314
        %p316 = pneg %p74
        %p317 = pneg %p71
        %p318 = pneg %p95
        %p319 = pneg %p92
        %p320 = pneg %p116
        %p321 = pneg %p113
        %p322 = pneg %p137
        %p323 = pneg %p134
        %p324 = pneg %p158
        %p325 = pneg %p155
        %p326 = pneg %p184
        %p327 = pneg %p181
        %s328 = sand.u32 %s171, 1
        %s329 = scalar_lea.sflag [#allocation4], %s328
        %s330 = sand.u32 %s171, 1
        %s331 = smul.addr %s330, 8
        %s332 = scalar_lea.vmem [#allocation10], %s331
        %v333 = vld [vmem:[%s282] sm:$0xff]
        %v334 = vld [vmem:[#allocation7] sm:$0xff]
        %v335 = vld [vmem:[#allocation7 + $0x8] sm:$0xff]
        %v336 = vld [vmem:[#allocation7 + $0x10] sm:$0xff]
        %v337 = vld [vmem:[#allocation7 + $0x18] sm:$0xff]
        %v338 = vld [vmem:[%s3] sm:$0x1]
        %v340 = vlaneseq
        %v341 = vshrl.u32 %v340, 7
        %v342 = vsub.s32 0, %v341
        %v343 = vrot.slane %v338, %v342
        %vm345 = vcmask 261120
        %v347 = vsel %vm345, %v333, 0
        %349 = vmatprep.subr.mxu0 0.0
        %350 = vmatpush1.msra.mxu0 %v334
        %351 = vmatprep.subr.mxu0 0.0
        %352 = vmatpush1.msra.mxu0 %v335
        %353 = vmatprep.subr.mxu0 0.0
        %354 = vmatpush1.msra.mxu0 %v336
        %355 = vmatprep.subr.mxu0 0.0
        %356 = vmatpush1.msra.mxu0 %v337
        %357 = vmatprep.subr.mxu0 0.0
        %358 = vmatpush1.msra.mxu0 0.0
        %359 = vmatprep.subr.mxu0 0.0
        %360 = vmatpush1.msra.mxu0 0.0
        %361 = vmatprep.subr.mxu0 0.0
        %362 = vmatpush1.msra.mxu0 0.0
        %363 = vmatprep.subr.mxu0 0.0
        %364 = vmatpush1.msra.mxu0 0.0
        %365 = vmatprep.subr.mxu0 0.0
        %366 = vmatpush1.msra.mxu0 0.0
        %367 = vmatprep.subr.mxu0 0.0
        %368 = vmatpush1.msra.mxu0 0.0
        %369 = vmatprep.subr.mxu0 0.0
        %370 = vmatpush1.msra.mxu0 0.0
        %371 = vmatprep.subr.mxu0 0.0
        %372 = vmatpush1.msra.mxu0 0.0
        %373 = vmatprep.subr.mxu0 0.0
        %374 = vmatpush1.msra.mxu0 0.0
        %375 = vmatprep.subr.mxu0 0.0
        %376 = vmatpush1.msra.mxu0 0.0
        %377 = vmatprep.subr.mxu0 0.0
        %378 = vmatpush1.msra.mxu0 0.0
        %379 = vmatprep.subr.mxu0 0.0
        %380 = vmatpush1.msra.mxu0 0.0
        %381 = vmatprep.subr.mxu0 0.0
        %382 = vmatpush1.msra.mxu0 0.0
        %383 = vmatprep.subr.mxu0 0.0
        %384 = vmatpush1.msra.mxu0 0.0
        %385 = vmatprep.subr.mxu0 0.0
        %386 = vmatpush1.msra.mxu0 0.0
        %387 = vmatprep.subr.mxu0 0.0
        %388 = vmatpush1.msra.mxu0 0.0
        %389 = vmatprep.subr.mxu0 0.0
        %390 = vmatpush1.msra.mxu0 0.0
        %391 = vmatprep.subr.mxu0 0.0
        %392 = vmatpush1.msra.mxu0 0.0
        %393 = vmatprep.subr.mxu0 0.0
        %394 = vmatpush1.msra.mxu0 0.0
        %395 = vmatprep.subr.mxu0 0.0
        %396 = vmatpush1.msra.mxu0 0.0
        %397 = vmatprep.subr.mxu0 0.0
        %398 = vmatpush1.msra.mxu0 0.0
        %399 = vmatprep.subr.mxu0 0.0
        %400 = vmatpush1.msra.mxu0 0.0
        %401 = vmatprep.subr.mxu0 0.0
        %402 = vmatpush1.msra.mxu0 0.0
        %403 = vmatprep.subr.mxu0 0.0
        %404 = vmatpush1.msra.mxu0 0.0
        %405 = vmatprep.subr.mxu0 0.0
        %406 = vmatpush1.msra.mxu0 0.0
        %407 = vmatprep.subr.mxu0 0.0
        %408 = vmatpush1.msra.mxu0 0.0
        %409 = vmatprep.subr.mxu0 0.0
        %410 = vmatpush1.msra.mxu0 0.0
        %411 = vmatprep.subr.mxu0 0.0
        %412 = vmatpush1.msra.mxu0 0.0
        %413 = vmatprep.mubr.f32.mxu0 0.0
        %414 = vmatmul.mubr.f32.gmra.mrb[0].mxu0 %v347
        %v415 = vpop.f32.mrb[0].mxu0
        %v416 = vadd.f32 %v343, %v415
        %v417 = vpop.f32.mrb[0].mxu0
        %418 = vdwg.mxu0
        %v419 = vld [vmem:[%s291] sm:$0xff]
        %v420 = vmax.f32 %v419, 0.0
        %v421 = vld [vmem:[#allocation8] sm:$0xff]
        %v422 = vld [vmem:[#allocation8 + $0x8] sm:$0xff]
        %v423 = vld [vmem:[%s5] sm:$0x1]
        %v425 = vlaneseq
        %v426 = vshrl.u32 %v425, 7
        %v427 = vsub.s32 0, %v426
        %v428 = vrot.slane %v423, %v427
        %vm430 = vcmask 130048
        %v432 = vsel %vm430, %v420, 0
        %434 = vmatprep.subr.mxu0 0.0
        %435 = vmatpush1.msra.mxu0 %v421
        %436 = vmatprep.subr.mxu0 0.0
        %437 = vmatpush1.msra.mxu0 %v422
        %438 = vmatprep.subr.mxu0 0.0
        %439 = vmatpush1.msra.mxu0 0.0
        %440 = vmatprep.subr.mxu0 0.0
        %441 = vmatpush1.msra.mxu0 0.0
        %442 = vmatprep.subr.mxu0 0.0
        %443 = vmatpush1.msra.mxu0 0.0
        %444 = vmatprep.subr.mxu0 0.0
        %445 = vmatpush1.msra.mxu0 0.0
        %446 = vmatprep.subr.mxu0 0.0
        %447 = vmatpush1.msra.mxu0 0.0
        %448 = vmatprep.subr.mxu0 0.0
        %449 = vmatpush1.msra.mxu0 0.0
        %450 = vmatprep.subr.mxu0 0.0
        %451 = vmatpush1.msra.mxu0 0.0
        %452 = vmatprep.subr.mxu0 0.0
        %453 = vmatpush1.msra.mxu0 0.0
        %454 = vmatprep.subr.mxu0 0.0
        %455 = vmatpush1.msra.mxu0 0.0
        %456 = vmatprep.subr.mxu0 0.0
        %457 = vmatpush1.msra.mxu0 0.0
        %458 = vmatprep.subr.mxu0 0.0
        %459 = vmatpush1.msra.mxu0 0.0
        %460 = vmatprep.subr.mxu0 0.0
        %461 = vmatpush1.msra.mxu0 0.0
        %462 = vmatprep.subr.mxu0 0.0
        %463 = vmatpush1.msra.mxu0 0.0
        %464 = vmatprep.subr.mxu0 0.0
        %465 = vmatpush1.msra.mxu0 0.0
        %466 = vmatprep.subr.mxu0 0.0
        %467 = vmatpush1.msra.mxu0 0.0
        %468 = vmatprep.subr.mxu0 0.0
        %469 = vmatpush1.msra.mxu0 0.0
        %470 = vmatprep.subr.mxu0 0.0
        %471 = vmatpush1.msra.mxu0 0.0
        %472 = vmatprep.subr.mxu0 0.0
        %473 = vmatpush1.msra.mxu0 0.0
        %474 = vmatprep.subr.mxu0 0.0
        %475 = vmatpush1.msra.mxu0 0.0
        %476 = vmatprep.subr.mxu0 0.0
        %477 = vmatpush1.msra.mxu0 0.0
        %478 = vmatprep.subr.mxu0 0.0
        %479 = vmatpush1.msra.mxu0 0.0
        %480 = vmatprep.subr.mxu0 0.0
        %481 = vmatpush1.msra.mxu0 0.0
        %482 = vmatprep.subr.mxu0 0.0
        %483 = vmatpush1.msra.mxu0 0.0
        %484 = vmatprep.subr.mxu0 0.0
        %485 = vmatpush1.msra.mxu0 0.0
        %486 = vmatprep.subr.mxu0 0.0
        %487 = vmatpush1.msra.mxu0 0.0
        %488 = vmatprep.subr.mxu0 0.0
        %489 = vmatpush1.msra.mxu0 0.0
        %490 = vmatprep.subr.mxu0 0.0
        %491 = vmatpush1.msra.mxu0 0.0
        %492 = vmatprep.subr.mxu0 0.0
        %493 = vmatpush1.msra.mxu0 0.0
        %494 = vmatprep.subr.mxu0 0.0
        %495 = vmatpush1.msra.mxu0 0.0
        %496 = vmatprep.subr.mxu0 0.0
        %497 = vmatpush1.msra.mxu0 0.0
        %498 = vmatprep.mubr.f32.mxu0 0.0
        %499 = vmatmul.mubr.f32.gmra.mrb[0].mxu0 %v432
        %v500 = vpop.f32.mrb[0].mxu0
        %v501 = vadd.f32 %v428, %v500
        %v502 = vpop.f32.mrb[0].mxu0
        %503 = vdwg.mxu0
        %v504 = vadd.f32 %v501, 1.0
        %v505 = vmul.f32 %v416, %v504
        %v506 = vmax.f32 %v505, 0.0
        %507 = vst.msk [vmem:[%s332] sm:$0xff] %vm345, %v506
        %s508 = sand.u32 %s171, 1
        %s509 = scalar_lea.sflag [#allocation4], %s508
        %s510 = sand.u32 %s171, 1
        %s511 = smul.addr %s510, 8
        %s512 = scalar_lea.vmem [#allocation10], %s511
        // Predicated region
        $region61: #{tpu_custom_call.1} parent=43 // pred_check
          %p513 = pneg %p181
        $region62: #{tpu_custom_call.1} parent=43 // pred_check_branch
          %515 = sbr.rel (%p513) target = $region64
        $region63: #{tpu_custom_call.1} parent=43 // pred_region
          %s517 = ssub.s32 128, 128
          %518 = vsyncadd %s509, %s517
          %s519 = smul.addr %s27, 128
          %s520 = scalar_lea.hbm %s6, %s519
          %s522 = sshll.u32 %s512, 4
          %s523 = int_to_ptr.vmem [resolvable:$true] %s522
          %525 = dma.vmem_to_hbm [thread:$0]  %s523, 128, %s520, %s509
        $region64: #{tpu_custom_call.1} parent=43 // pred_fallthru
          _
      $region44: #{tpu_custom_call.1} parent=5 // pred_fallthru
        _
      %p526 = scmp.le.s32.totalorder 2, %s22
      // Predicated region
      $region65: #{tpu_custom_call.1} parent=5 // pred_check
        %p527 = pneg %p526
      $region66: #{tpu_custom_call.1} parent=5 // pred_check_branch
        %529 = sbr.rel (%p527) target = $region68
      $region67: #{tpu_custom_call.1} parent=5 // pred_region
        %s530 = ssub.s32 %s22, 2
        // Predicated region
        $region69: #{tpu_custom_call.1} parent=67 // pred_check
          %p531 = pneg %p187
        $region70: #{tpu_custom_call.1} parent=67 // pred_check_branch
          %533 = sbr.rel (%p531) target = $region72
        $region71: #{tpu_custom_call.1} parent=67 // pred_region
          %s534 = sand.u32 %s172, 1
          %s535 = scalar_lea.sflag [#allocation4], %s534
          %s536 = sand.u32 %s172, 1
          %s537 = smul.addr %s536, 8
          %s538 = scalar_lea.vmem [#allocation10], %s537
          %539 = dma.done %s535, 128
        $region72: #{tpu_custom_call.1} parent=67 // pred_fallthru
          _
      $region68: #{tpu_custom_call.1} parent=5 // pred_fallthru
        _
    $region6: #{tpu_custom_call.1} parent=1 // loop_footer
      %s26 = sadd.s32 1, %s22
    $region7: #{tpu_custom_call.1} parent=1 // loop_footer_branch
      %21 = sbr.rel target = $region3
    $region8: #{tpu_custom_call.1} parent=1 // loop_exit
      _
    %540 = vsyncpa [#allocation3], 1
    %s541 = scalar_lea.sflag [#allocation3], 1
    %542 = vsyncpa %s541, 1
    %543 = vsyncpa [#allocation6], 1
    %s544 = scalar_lea.sflag [#allocation6], 1
    %545 = vsyncpa %s544, 1
    %546 = vsyncpa [#allocation9], 1
    %547 = vsyncpa [#allocation4], 1
    %s548 = scalar_lea.sflag [#allocation4], 1
    %549 = vsyncpa %s548, 1

</llo_original>
